<compile_context>
chip_gen: v7x
topology: tpu7x:2x2x1
jax: 0.10.0
libtpu: 0.0.40
codegen_flags: <defaults>
</compile_context>

<pallas_src>
import jax
import jax.numpy as jnp
from jax.experimental import pallas as pl
from jax.experimental.pallas import tpu as pltpu


def _round_up(v, m):
    return ((v + m - 1) // m) * m


def _make_kernel(ax_first):
    """Build the row-tiled GCN kernel. `ax_first` picks the matmul order."""
    if ax_first:
        # (A_tile @ x) @ W1 : the O(N^2) MXU term carries F_pad (<= H_pad).
        def kernel(a_ref, x_ref, w1_ref, b1_ref, st_ref, ic_ref, w2_ref,
                   b2_ref, out_ref, acc_ref):
            i = pl.program_id(0)

            @pl.when(i == 0)
            def _():
                acc_ref[...] = jnp.zeros_like(acc_ref)

            ax = jnp.dot(a_ref[...], x_ref[...],
                         preferred_element_type=jnp.float32)
            h = jnp.dot(ax.astype(jnp.bfloat16), w1_ref[...],
                        preferred_element_type=jnp.float32) + b1_ref[...]
            h = jnp.maximum(h, 0.0)
            # segment-sum readout: one-hot S_tile [G_pad, tn] @ h [tn, H_pad]
            acc_ref[...] += jnp.dot(st_ref[...], h.astype(jnp.bfloat16),
                                    preferred_element_type=jnp.float32)

            @pl.when(i == pl.num_programs(0) - 1)
            def _():
                pooled = acc_ref[...] * ic_ref[...]          # mean = sum/count
                out_ref[...] = jnp.dot(pooled.astype(jnp.bfloat16), w2_ref[...],
                                       preferred_element_type=jnp.float32
                                       ) + b2_ref[...]
        return kernel

    # A_tile @ (x @ W1): cache XW once in VMEM, used when H_pad < F_pad.
    def kernel(a_ref, x_ref, w1_ref, b1_ref, st_ref, ic_ref, w2_ref,
               b2_ref, out_ref, acc_ref, xw_ref):
        i = pl.program_id(0)

        @pl.when(i == 0)
        def _():
            acc_ref[...] = jnp.zeros_like(acc_ref)
            xw_ref[...] = jnp.dot(x_ref[...], w1_ref[...],
                                  preferred_element_type=jnp.float32
                                  ).astype(jnp.bfloat16)

        h = jnp.dot(a_ref[...], xw_ref[...],
                    preferred_element_type=jnp.float32) + b1_ref[...]
        h = jnp.maximum(h, 0.0)
        acc_ref[...] += jnp.dot(st_ref[...], h.astype(jnp.bfloat16),
                                preferred_element_type=jnp.float32)

        @pl.when(i == pl.num_programs(0) - 1)
        def _():
            pooled = acc_ref[...] * ic_ref[...]
            out_ref[...] = jnp.dot(pooled.astype(jnp.bfloat16), w2_ref[...],
                                   preferred_element_type=jnp.float32
                                   ) + b2_ref[...]
    return kernel


def gnn_forward(x, edge_index, batch, params, num_graphs, *, row_tile=128):
    """Plain-JAX glue (adjacency / pooling construction) + Pallas hot path."""
    N, F = x.shape
    W1, b1, W2, b2 = params
    H = W1.shape[1]
    C = W2.shape[1]
    G = num_graphs

    # ---- glue: dense GCN-normalized adjacency with self loops -------------
    # TODO(synk): for large graphs replace this dense O(N^2) adjacency with a
    # scalar-prefetch sparse SpMM (edge/row offsets driving the index_map).
    src, dst = edge_index[0], edge_index[1]
    A = jnp.zeros((N, N), jnp.float32)
    A = A.at[src, dst].set(1.0)
    A = A.at[dst, src].set(1.0)              # symmetrize (undirected graph)
    A = A + jnp.eye(N, dtype=jnp.float32)    # self loops
    deg = jnp.sum(A, axis=1)
    d_inv_sqrt = jnp.where(deg > 0, 1.0 / jnp.sqrt(deg), 0.0)
    A_norm = A * d_inv_sqrt[:, None] * d_inv_sqrt[None, :]

    # ---- glue: one-hot segment matrix (exact in bf16) + 1/count (f32) -----
    onehot = (jnp.arange(G)[:, None] == batch[None, :]).astype(jnp.float32)  # [G, N]
    counts = jnp.sum(onehot, axis=1, keepdims=True)
    inv_count = jnp.where(counts > 0, 1.0 / counts, 0.0)                     # [G, 1]

    # ---- lane / tile padding ----------------------------------------------
    LANE = 128
    tn = row_tile
    N_pad = _round_up(max(N, tn), tn)
    F_pad = _round_up(F, LANE)
    H_pad = _round_up(H, LANE)
    C_pad = _round_up(C, LANE)
    G_pad = _round_up(G, 8)

    def pad2(a, r, c):
        return jnp.pad(a, ((0, r - a.shape[0]), (0, c - a.shape[1])))

    A_p = pad2(A_norm, N_pad, N_pad).astype(jnp.bfloat16)
    x_p = pad2(x.astype(jnp.float32), N_pad, F_pad).astype(jnp.bfloat16)
    W1_p = pad2(W1, F_pad, H_pad).astype(jnp.bfloat16)
    b1_p = pad2(b1.reshape(1, H), 1, H_pad)                 # f32
    S_p = pad2(onehot, G_pad, N_pad).astype(jnp.bfloat16)   # one-hot (exact)
    ic_p = pad2(inv_count, G_pad, 1)                        # f32
    W2_p = pad2(W2, H_pad, C_pad).astype(jnp.bfloat16)
    b2_p = pad2(b2.reshape(1, C), 1, C_pad)                 # f32

    num_tiles = N_pad // tn
    ax_first = F_pad <= H_pad

    in_specs = [
        pl.BlockSpec((tn, N_pad), lambda i: (i, 0)),        # A_norm row tile
        pl.BlockSpec((N_pad, F_pad), lambda i: (0, 0)),     # x (resident)
        pl.BlockSpec((F_pad, H_pad), lambda i: (0, 0)),     # W1
        pl.BlockSpec((1, H_pad), lambda i: (0, 0)),         # b1
        pl.BlockSpec((G_pad, tn), lambda i: (0, i)),        # segment one-hot tile
        pl.BlockSpec((G_pad, 1), lambda i: (0, 0)),         # 1 / node count
        pl.BlockSpec((H_pad, C_pad), lambda i: (0, 0)),     # W2
        pl.BlockSpec((1, C_pad), lambda i: (0, 0)),         # b2
    ]
    out_spec = pl.BlockSpec((G_pad, C_pad), lambda i: (0, 0))

    scratch_shapes = [pltpu.VMEM((G_pad, H_pad), jnp.float32)]
    if not ax_first:
        scratch_shapes.append(pltpu.VMEM((N_pad, H_pad), jnp.bfloat16))

    # Explicit VMEM budget: double-buffered block bytes + scratch + f32
    # intermediates, 2x headroom, capped at 64 MiB (fits v7x; fine on v5e/v6e).
    blk_bytes = (
        2 * (tn * N_pad * 2 + N_pad * F_pad * 2 + F_pad * H_pad * 2
             + H_pad * 4 + G_pad * tn * 2 + G_pad * 4
             + H_pad * C_pad * 2 + C_pad * 4 + G_pad * C_pad * 4)
        + G_pad * H_pad * 4
        + (0 if ax_first else N_pad * H_pad * 2)
        + 2 * tn * max(F_pad, H_pad) * 4
    )
    vmem_limit = int(min(max(2 * blk_bytes, 32 * 1024 * 1024), 64 * 1024 * 1024))

    out_p = pl.pallas_call(
        _make_kernel(ax_first),
        out_shape=jax.ShapeDtypeStruct((G_pad, C_pad), jnp.float32),
        grid_spec=pltpu.PrefetchScalarGridSpec(
            num_scalar_prefetch=0,
            grid=(num_tiles,),
            in_specs=in_specs,
            out_specs=out_spec,
            scratch_shapes=scratch_shapes,
        ),
        compiler_params=pltpu.CompilerParams(
            # The row-tile axis feeds the pooled accumulator -> reduction axis.
            dimension_semantics=("arbitrary",),
            vmem_limit_bytes=vmem_limit,
        ),
    )(A_p, x_p, W1_p, b1_p, S_p, ic_p, W2_p, b2_p)

    return out_p[:G, :C]


def gnn_reference(x, edge_index, batch, params, num_graphs):
    """Pure-JAX f32 reference for validation."""
    W1, b1, W2, b2 = params
    N = x.shape[0]
    src, dst = edge_index[0], edge_index[1]
    A = jnp.zeros((N, N), jnp.float32)
    A = A.at[src, dst].set(1.0)
    A = A.at[dst, src].set(1.0)
    A = A + jnp.eye(N, dtype=jnp.float32)
    deg = jnp.sum(A, axis=1)
    dis = jnp.where(deg > 0, 1.0 / jnp.sqrt(deg), 0.0)
    A_norm = A * dis[:, None] * dis[None, :]
    h = jnp.maximum(A_norm @ (x @ W1) + b1, 0.0)
    onehot = (jnp.arange(num_graphs)[:, None] == batch[None, :]).astype(jnp.float32)
    counts = jnp.maximum(onehot.sum(1, keepdims=True), 1.0)
    pooled = (onehot @ h) / counts
    return pooled @ W2 + b2


def init_params(key, in_features, hidden, num_classes):
    k1, k2 = jax.random.split(key)
    W1 = jax.random.normal(k1, (in_features, hidden), jnp.float32) * 0.1
    b1 = jnp.zeros((hidden,), jnp.float32)
    W2 = jax.random.normal(k2, (hidden, num_classes), jnp.float32) * 0.1
    b2 = jnp.zeros((num_classes,), jnp.float32)
    return W1, b1, W2, b2


if __name__ == "__main__":
    key = jax.random.PRNGKey(0)

    # 2 ring graphs x 80 nodes each (N=160) so the row-tiled grid runs 2 tiles
    # (N padded to 256 with row_tile=128) and exercises the accumulator path.
    NODES_PER_GRAPH, G = 80, 2
    N, F, HIDDEN, CLASSES = NODES_PER_GRAPH * G, 16, 32, 8

    kx, kp = jax.random.split(key)
    x = jax.random.normal(kx, (N, F), jnp.float32)

    def ring_edges(n, offset):
        idx = jnp.arange(n)
        return jnp.stack([idx + offset, (idx + 1) % n + offset])

    edge_index = jnp.concatenate(
        [ring_edges(NODES_PER_GRAPH, g * NODES_PER_GRAPH) for g in range(G)],
        axis=1,
    ).astype(jnp.int32)
    batch = jnp.concatenate(
        [jnp.full((NODES_PER_GRAPH,), g, jnp.int32) for g in range(G)]
    )

    params = init_params(kp, F, HIDDEN, CLASSES)

    out = gnn_forward(x, edge_index, batch, params, num_graphs=G, row_tile=128)
    out = jax.block_until_ready(out)
    assert out.shape == (G, CLASSES)

    ref = gnn_reference(x, edge_index, batch, params, G)
    assert jnp.allclose(out, ref, rtol=5e-2, atol=1e-2), (out, ref)
    print("KERNEL_OK")
</pallas_src>

<mosaic_0001>
module attributes {stable_mosaic.version = 11 : i64} {
  func.func @kernel(%arg0: i32, %arg1: memref<128x256xbf16, #tpu.memory_space<vmem>>, %arg2: memref<256x128xbf16, #tpu.memory_space<vmem>>, %arg3: memref<128x128xbf16, #tpu.memory_space<vmem>>, %arg4: memref<1x128xf32, #tpu.memory_space<vmem>>, %arg5: memref<8x128xbf16, #tpu.memory_space<vmem>>, %arg6: memref<8x1xf32, #tpu.memory_space<vmem>>, %arg7: memref<128x128xbf16, #tpu.memory_space<vmem>>, %arg8: memref<1x128xf32, #tpu.memory_space<vmem>>, %arg9: memref<8x128xf32, #tpu.memory_space<vmem>>, %arg10: memref<8x128xf32, #tpu.memory_space<vmem>>) attributes {dimension_semantics = [#tpu.dimension_semantics<arbitrary>], iteration_bounds = array<i64: 2>, scalar_prefetch = 0 : i64, scratch_operands = 1 : i64, tpu.core_type = #tpu.core_type<tc>, window_params = [{transform_indices = @transform_0, window_bounds = array<i64: 128, 256>}, {pipeline_mode = #tpu.pipeline_mode<synchronous>, transform_indices = @transform_1, window_bounds = array<i64: 256, 128>}, {pipeline_mode = #tpu.pipeline_mode<synchronous>, transform_indices = @transform_2, window_bounds = array<i64: 128, 128>}, {pipeline_mode = #tpu.pipeline_mode<synchronous>, transform_indices = @transform_3, window_bounds = array<i64: 1, 128>}, {transform_indices = @transform_4, window_bounds = array<i64: 8, 128>}, {pipeline_mode = #tpu.pipeline_mode<synchronous>, transform_indices = @transform_5, window_bounds = array<i64: 8, 1>}, {pipeline_mode = #tpu.pipeline_mode<synchronous>, transform_indices = @transform_6, window_bounds = array<i64: 128, 128>}, {pipeline_mode = #tpu.pipeline_mode<synchronous>, transform_indices = @transform_7, window_bounds = array<i64: 1, 128>}, {pipeline_mode = #tpu.pipeline_mode<synchronous>, transform_indices = @transform_8, window_bounds = array<i64: 8, 128>}]} {
    %c0_i32 = arith.constant 0 : i32
    %0 = arith.cmpi eq, %arg0, %c0_i32 : i32
    %1 = arith.extui %0 : i1 to i32
    %c0_i32_0 = arith.constant 0 : i32
    %2 = arith.cmpi ne, %1, %c0_i32_0 : i32
    scf.if %2 {
      %cst_18 = arith.constant 0.000000e+00 : f32
      %23 = vector.broadcast %cst_18 : f32 to vector<8x128xf32>
      %c0_19 = arith.constant 0 : index
      %c0_20 = arith.constant 0 : index
      %24 = vector.load %arg10[%c0_19, %c0_20] : memref<8x128xf32, #tpu.memory_space<vmem>>, vector<8x128xf32>
      tpu.vector_store %arg10[%c0_19, %c0_20], %23 {strides = array<i32>} : memref<8x128xf32, #tpu.memory_space<vmem>>, vector<8x128xf32>,
    } else {
    }
    %c0 = arith.constant 0 : index
    %c0_1 = arith.constant 0 : index
    %3 = vector.load %arg1[%c0, %c0_1] : memref<128x256xbf16, #tpu.memory_space<vmem>>, vector<128x256xbf16>
    %c0_2 = arith.constant 0 : index
    %c0_3 = arith.constant 0 : index
    %4 = vector.load %arg2[%c0_2, %c0_3] : memref<256x128xbf16, #tpu.memory_space<vmem>>, vector<256x128xbf16>
    %cst = arith.constant dense<0.000000e+00> : vector<128x128xf32>
    %5 = tpu.matmul %3, %4, %cst {dimension_numbers = #tpu.dot_dimension_numbers<[1], [0], [0], [1], [0, 0, 1, 1], [], []>} : vector<128x256xbf16>, vector<256x128xbf16>, vector<128x128xf32> -> vector<128x128xf32>
    %6 = arith.truncf %5 : vector<128x128xf32> to vector<128x128xbf16>
    %c0_4 = arith.constant 0 : index
    %c0_5 = arith.constant 0 : index
    %7 = vector.load %arg3[%c0_4, %c0_5] : memref<128x128xbf16, #tpu.memory_space<vmem>>, vector<128x128xbf16>
    %cst_6 = arith.constant dense<0.000000e+00> : vector<128x128xf32>
    %8 = tpu.matmul %6, %7, %cst_6 {dimension_numbers = #tpu.dot_dimension_numbers<[1], [0], [0], [1], [0, 0, 1, 1], [], []>} : vector<128x128xbf16>, vector<128x128xbf16>, vector<128x128xf32> -> vector<128x128xf32>
    %c0_7 = arith.constant 0 : index
    %c0_8 = arith.constant 0 : index
    %9 = vector.load %arg4[%c0_7, %c0_8] : memref<1x128xf32, #tpu.memory_space<vmem>>, vector<1x128xf32>
    %10 = vector.broadcast %9 : vector<1x128xf32> to vector<128x128xf32>
    %11 = arith.addf %8, %10 : vector<128x128xf32>
    %cst_9 = arith.constant 0.000000e+00 : f32
    %12 = vector.broadcast %cst_9 : f32 to vector<128x128xf32>
    %13 = arith.maximumf %11, %12 : vector<128x128xf32>
    %c0_10 = arith.constant 0 : index
    %c0_11 = arith.constant 0 : index
    %14 = vector.load %arg10[%c0_10, %c0_11] : memref<8x128xf32, #tpu.memory_space<vmem>>, vector<8x128xf32>
    %c0_12 = arith.constant 0 : index
    %c0_13 = arith.constant 0 : index
    %15 = vector.load %arg5[%c0_12, %c0_13] : memref<8x128xbf16, #tpu.memory_space<vmem>>, vector<8x128xbf16>
    %16 = arith.truncf %13 : vector<128x128xf32> to vector<128x128xbf16>
    %cst_14 = arith.constant dense<0.000000e+00> : vector<8x128xf32>
    %17 = tpu.matmul %15, %16, %cst_14 {dimension_numbers = #tpu.dot_dimension_numbers<[1], [0], [0], [1], [0, 0, 1, 1], [], []>} : vector<8x128xbf16>, vector<128x128xbf16>, vector<8x128xf32> -> vector<8x128xf32>
    %18 = arith.addf %14, %17 : vector<8x128xf32>
    %c0_15 = arith.constant 0 : index
    %c0_16 = arith.constant 0 : index
    %19 = vector.load %arg10[%c0_15, %c0_16] : memref<8x128xf32, #tpu.memory_space<vmem>>, vector<8x128xf32>
    tpu.vector_store %arg10[%c0_15, %c0_16], %18 {strides = array<i32>} : memref<8x128xf32, #tpu.memory_space<vmem>>, vector<8x128xf32>,
    %c1_i32 = arith.constant 1 : i32
    %20 = arith.cmpi eq, %arg0, %c1_i32 : i32
    %21 = arith.extui %20 : i1 to i32
    %c0_i32_17 = arith.constant 0 : i32
    %22 = arith.cmpi ne, %21, %c0_i32_17 : i32
    scf.if %22 {
      %c0_18 = arith.constant 0 : index
      %c0_19 = arith.constant 0 : index
      %23 = vector.load %arg10[%c0_18, %c0_19] : memref<8x128xf32, #tpu.memory_space<vmem>>, vector<8x128xf32>
      %c0_20 = arith.constant 0 : index
      %c0_21 = arith.constant 0 : index
      %24 = vector.load %arg6[%c0_20, %c0_21] : memref<8x1xf32, #tpu.memory_space<vmem>>, vector<8x1xf32>
      %25 = vector.broadcast %24 : vector<8x1xf32> to vector<8x128xf32>
      %26 = arith.mulf %23, %25 : vector<8x128xf32>
      %27 = arith.truncf %26 : vector<8x128xf32> to vector<8x128xbf16>
      %c0_22 = arith.constant 0 : index
      %c0_23 = arith.constant 0 : index
      %28 = vector.load %arg7[%c0_22, %c0_23] : memref<128x128xbf16, #tpu.memory_space<vmem>>, vector<128x128xbf16>
      %cst_24 = arith.constant dense<0.000000e+00> : vector<8x128xf32>
      %29 = tpu.matmul %27, %28, %cst_24 {dimension_numbers = #tpu.dot_dimension_numbers<[1], [0], [0], [1], [0, 0, 1, 1], [], []>} : vector<8x128xbf16>, vector<128x128xbf16>, vector<8x128xf32> -> vector<8x128xf32>
      %c0_25 = arith.constant 0 : index
      %c0_26 = arith.constant 0 : index
      %30 = vector.load %arg8[%c0_25, %c0_26] : memref<1x128xf32, #tpu.memory_space<vmem>>, vector<1x128xf32>
      %31 = vector.broadcast %30 : vector<1x128xf32> to vector<8x128xf32>
      %32 = arith.addf %29, %31 : vector<8x128xf32>
      %c0_27 = arith.constant 0 : index
      %c0_28 = arith.constant 0 : index
      %33 = vector.load %arg9[%c0_27, %c0_28] : memref<8x128xf32, #tpu.memory_space<vmem>>, vector<8x128xf32>
      tpu.vector_store %arg9[%c0_27, %c0_28], %32 {strides = array<i32>} : memref<8x128xf32, #tpu.memory_space<vmem>>, vector<8x128xf32>,
    } else {
    }
    return
  }
  func.func @transform_0(%arg0: i32) -> (i32, i32) {
    %c0_i32 = arith.constant 0 : i32
    %c0_i32_0 = arith.constant 0 : i32
    return %arg0, %c0_i32 : i32, i32
  }
  func.func @transform_1(%arg0: i32) -> (i32, i32) {
    %c0_i32 = arith.constant 0 : i32
    %c0_i32_0 = arith.constant 0 : i32
    %c0_i32_1 = arith.constant 0 : i32
    return %c0_i32, %c0_i32_0 : i32, i32
  }
  func.func @transform_2(%arg0: i32) -> (i32, i32) {
    %c0_i32 = arith.constant 0 : i32
    %c0_i32_0 = arith.constant 0 : i32
    %c0_i32_1 = arith.constant 0 : i32
    return %c0_i32, %c0_i32_0 : i32, i32
  }
  func.func @transform_3(%arg0: i32) -> (i32, i32) {
    %c0_i32 = arith.constant 0 : i32
    %c0_i32_0 = arith.constant 0 : i32
    %c0_i32_1 = arith.constant 0 : i32
    return %c0_i32, %c0_i32_0 : i32, i32
  }
  func.func @transform_4(%arg0: i32) -> (i32, i32) {
    %c0_i32 = arith.constant 0 : i32
    %c0_i32_0 = arith.constant 0 : i32
    return %c0_i32, %arg0 : i32, i32
  }
  func.func @transform_5(%arg0: i32) -> (i32, i32) {
    %c0_i32 = arith.constant 0 : i32
    %c0_i32_0 = arith.constant 0 : i32
    %c0_i32_1 = arith.constant 0 : i32
    return %c0_i32, %c0_i32_0 : i32, i32
  }
  func.func @transform_6(%arg0: i32) -> (i32, i32) {
    %c0_i32 = arith.constant 0 : i32
    %c0_i32_0 = arith.constant 0 : i32
    %c0_i32_1 = arith.constant 0 : i32
    return %c0_i32, %c0_i32_0 : i32, i32
  }
  func.func @transform_7(%arg0: i32) -> (i32, i32) {
    %c0_i32 = arith.constant 0 : i32
    %c0_i32_0 = arith.constant 0 : i32
    %c0_i32_1 = arith.constant 0 : i32
    return %c0_i32, %c0_i32_0 : i32, i32
  }
  func.func @transform_8(%arg0: i32) -> (i32, i32) {
    %c0_i32 = arith.constant 0 : i32
    %c0_i32_0 = arith.constant 0 : i32
    %c0_i32_1 = arith.constant 0 : i32
    return %c0_i32, %c0_i32_0 : i32, i32
  }
}

</mosaic_0001>

<llo_original>
// kernel: tpu_custom_call.1
$region0: #{tpu_custom_call.1}
  #allocation0 [shape = 'u32[]', space=smem, size = 0x4, offset = 0x4, fixed_abs, tag = 'smem constant byte address 0x4 - core index']
  #allocation1 [shape = 'u32[144,128]{1,0:T(1,128)}', space=vmem, size = 0x12000, scoped, tag = 'internal scratch']
  #allocation2 [shape = 'f32[8,128]{1,0:T(8,128)}', space=vmem, size = 0x1000, scoped, tag = 'scratch operand']
  %s0 = inlined_call_operand.hbm [shape: bf16[256,256], index: 0, kind: input, shape index: {}]
  %s1 = inlined_call_operand.hbm [shape: bf16[256,128], index: 1, kind: input, shape index: {}]
  %s2 = inlined_call_operand.hbm [shape: bf16[128,128], index: 2, kind: input, shape index: {}]
  %s3 = inlined_call_operand.vmem [shape: f32[1,128], index: 3, kind: input, shape index: {}]
  %s4 = inlined_call_operand.vmem [shape: bf16[8,256], index: 4, kind: input, shape index: {}]
  %s5 = inlined_call_operand.vmem [shape: f32[8,1], index: 5, kind: input, shape index: {}]
  %s6 = inlined_call_operand.hbm [shape: bf16[128,128], index: 6, kind: input, shape index: {}]
  %s7 = inlined_call_operand.vmem [shape: f32[1,128], index: 7, kind: input, shape index: {}]
  %s8 = inlined_call_operand.hbm [shape: f32[8,128], index: 8, kind: output, shape index: {}]
  %s9 = sld [smem:[#allocation0]]
  $region89: #{tpu_custom_call.1} parent=0
    _
  %s11 = ssub.s32 1, %s9
  %s12 = scalar_select 0, %s11, %s9
  $region1: #{tpu_custom_call.1} parent=0
    #allocation3 [shape = 'u8[131072]{0}', space=vmem, size = 0x20000, scoped, tag = 'input window, operand 0']
    #allocation4 [shape = 's32[2]{0}', space=sflag, size = 0x8, scoped, tag = 'scoped memory for tpu_custom_call.1']
    #allocation5 [shape = 's32[2]{0}', space=sflag, size = 0x8, scoped, tag = 'scoped memory for tpu_custom_call.1']
    #allocation6 [shape = 'u8[65536]{0}', space=vmem, size = 0x10000, scoped, tag = 'input window, operand 1, single buffered']
    #allocation7 [shape = 's32[1]{0}', space=sflag, size = 0x4, scoped, tag = 'scoped memory for tpu_custom_call.1']
    #allocation8 [shape = 'u8[32768]{0}', space=vmem, size = 0x8000, scoped, tag = 'input window, operand 2, single buffered']
    #allocation9 [shape = 'u8[32768]{0}', space=vmem, size = 0x8000, scoped, tag = 'input window, operand 6, single buffered']
    #allocation10 [shape = 's32[1]{0}', space=sflag, size = 0x4, scoped, tag = 'scoped memory for tpu_custom_call.1']
    #allocation11 [shape = 'u8[4096]{0}', space=vmem, size = 0x1000, scoped, tag = 'output window, operand 0, single buffered']
    %13 = vsyncpa [#allocation4], 0
    %s14 = scalar_lea.sflag [#allocation4], 1
    %15 = vsyncpa %s14, 0
    %16 = vsyncpa [#allocation7], 0
    %17 = vsyncpa [#allocation10], 0
    %18 = vsyncpa [#allocation5], 0
    loop: start=0, step=1, limit=4
    $region2: #{tpu_custom_call.1} parent=1 // loop_pre_header
      _
    $region3: #{tpu_custom_call.1} parent=1 // loop_header
      %s20 = sphi 0, %s24
      %p21 = scmp.ge.s32.totalorder %s20, 4
      %s30 = sphi 0, %s32
      %s33 = sphi 0, %s30
      %s34 = sphi 0, %s33
      %s50 = sphi 0, %s34
      %s54 = sphi 0, %s54
      %s56 = sphi 0, %s54
      %s57 = sphi 0, %s56
      %s71 = sphi 0, %s57
      %s75 = sphi 0, %s75
      %s77 = sphi 0, %s75
      %s78 = sphi 0, %s77
      %s92 = sphi 0, %s78
      %s96 = sphi 0, %s96
      %s98 = sphi 0, %s96
      %s99 = sphi 0, %s98
      %s113 = sphi 0, %s99
      %s119 = sphi 0, %s121
      %s122 = sphi 0, %s119
      %s123 = sphi 0, %s122
      %s139 = sphi 0, %s123
      %s143 = sphi 0, %s143
      %s145 = sphi 0, %s143
      %s146 = sphi 0, %s145
      %s160 = sphi 0, %s146
      %s164 = sphi 0, %s164
      %s166 = sphi 0, %s164
      %s167 = sphi 0, %s166
      %s181 = sphi 0, %s167
      %s185 = sphi 0, %s185
      %s187 = sphi 0, %s185
      %s188 = sphi 0, %s187
      %s202 = sphi 0, %s188
      %s206 = sphi 0, %s206
      %s208 = sphi 0, %s206
      %s209 = sphi 0, %s208
      %s223 = sphi 0, %s209
    $region4: #{tpu_custom_call.1} parent=1 // loop_header_branch
      %23 = sbr.rel (%p21) target = $region8
    $region5: #{tpu_custom_call.1} parent=1 // loop_body
      %s25 = ssub.s32 %s20, 1
      %s26 = ssub.s32 %s20, 2
      %s27 = sadd.s32 %s20, 1
      %s28 = ssub.s32 %s20, %s27
      %p29 = scmp.eq.s32.totalorder %s28, 0
      %s31 = sadd.s32 %s30, 1
      %s32 = scalar_select %p29, %s30, %s31
      %p35 = pneg %p29
      %p36 = scmp.eq.s32.totalorder %s20, 1
      %p37 = por %p35, %p36
      %p38 = scmp.ne.s32.totalorder %s30, %s33
      %p39 = scmp.eq.s32.totalorder %s20, 0
      %p40 = por %p38, %p39
      %p41 = scmp.ne.s32.totalorder %s30, %s33
      %p42 = scmp.eq.s32.totalorder %s25, 1
      %p43 = por %p41, %p42
      %p44 = scmp.ne.s32.totalorder %s33, %s34
      %p45 = scmp.eq.s32.totalorder %s25, 0
      %p46 = por %p44, %p45
      %p47 = scmp.ne.s32.totalorder %s33, %s34
      %p48 = scmp.eq.s32.totalorder %s26, 1
      %p49 = por %p47, %p48
      %p51 = scmp.ne.s32.totalorder %s34, %s50
      %p52 = scmp.eq.s32.totalorder %s26, 0
      %p53 = por %p51, %p52
      %s55 = sadd.s32 %s54, 1
      %p58 = scmp.eq.s32.totalorder %s20, 1
      %p59 = scmp.ne.s32.totalorder %s54, %s56
      %p60 = scmp.eq.s32.totalorder %s20, 0
      %p61 = por %p59, %p60
      %p62 = scmp.ne.s32.totalorder %s54, %s56
      %p63 = scmp.eq.s32.totalorder %s25, 1
      %p64 = por %p62, %p63
      %p65 = scmp.ne.s32.totalorder %s56, %s57
      %p66 = scmp.eq.s32.totalorder %s25, 0
      %p67 = por %p65, %p66
      %p68 = scmp.ne.s32.totalorder %s56, %s57
      %p69 = scmp.eq.s32.totalorder %s26, 1
      %p70 = por %p68, %p69
      %p72 = scmp.ne.s32.totalorder %s57, %s71
      %p73 = scmp.eq.s32.totalorder %s26, 0
      %p74 = por %p72, %p73
      %s76 = sadd.s32 %s75, 1
      %p79 = scmp.eq.s32.totalorder %s20, 1
      %p80 = scmp.ne.s32.totalorder %s75, %s77
      %p81 = scmp.eq.s32.totalorder %s20, 0
      %p82 = por %p80, %p81
      %p83 = scmp.ne.s32.totalorder %s75, %s77
      %p84 = scmp.eq.s32.totalorder %s25, 1
      %p85 = por %p83, %p84
      %p86 = scmp.ne.s32.totalorder %s77, %s78
      %p87 = scmp.eq.s32.totalorder %s25, 0
      %p88 = por %p86, %p87
      %p89 = scmp.ne.s32.totalorder %s77, %s78
      %p90 = scmp.eq.s32.totalorder %s26, 1
      %p91 = por %p89, %p90
      %p93 = scmp.ne.s32.totalorder %s78, %s92
      %p94 = scmp.eq.s32.totalorder %s26, 0
      %p95 = por %p93, %p94
      %s97 = sadd.s32 %s96, 1
      %p100 = scmp.eq.s32.totalorder %s20, 1
      %p101 = scmp.ne.s32.totalorder %s96, %s98
      %p102 = scmp.eq.s32.totalorder %s20, 0
      %p103 = por %p101, %p102
      %p104 = scmp.ne.s32.totalorder %s96, %s98
      %p105 = scmp.eq.s32.totalorder %s25, 1
      %p106 = por %p104, %p105
      %p107 = scmp.ne.s32.totalorder %s98, %s99
      %p108 = scmp.eq.s32.totalorder %s25, 0
      %p109 = por %p107, %p108
      %p110 = scmp.ne.s32.totalorder %s98, %s99
      %p111 = scmp.eq.s32.totalorder %s26, 1
      %p112 = por %p110, %p111
      %p114 = scmp.ne.s32.totalorder %s99, %s113
      %p115 = scmp.eq.s32.totalorder %s26, 0
      %p116 = por %p114, %p115
      %s117 = ssub.s32 %s20, %s27
      %p118 = scmp.eq.s32.totalorder %s117, 0
      %s120 = sadd.s32 %s119, 1
      %s121 = scalar_select %p118, %s119, %s120
      %p124 = pneg %p118
      %p125 = scmp.eq.s32.totalorder %s20, 1
      %p126 = por %p124, %p125
      %p127 = scmp.ne.s32.totalorder %s119, %s122
      %p128 = scmp.eq.s32.totalorder %s20, 0
      %p129 = por %p127, %p128
      %p130 = scmp.ne.s32.totalorder %s119, %s122
      %p131 = scmp.eq.s32.totalorder %s25, 1
      %p132 = por %p130, %p131
      %p133 = scmp.ne.s32.totalorder %s122, %s123
      %p134 = scmp.eq.s32.totalorder %s25, 0
      %p135 = por %p133, %p134
      %p136 = scmp.ne.s32.totalorder %s122, %s123
      %p137 = scmp.eq.s32.totalorder %s26, 1
      %p138 = por %p136, %p137
      %p140 = scmp.ne.s32.totalorder %s123, %s139
      %p141 = scmp.eq.s32.totalorder %s26, 0
      %p142 = por %p140, %p141
      %s144 = sadd.s32 %s143, 1
      %p147 = scmp.eq.s32.totalorder %s20, 1
      %p148 = scmp.ne.s32.totalorder %s143, %s145
      %p149 = scmp.eq.s32.totalorder %s20, 0
      %p150 = por %p148, %p149
      %p151 = scmp.ne.s32.totalorder %s143, %s145
      %p152 = scmp.eq.s32.totalorder %s25, 1
      %p153 = por %p151, %p152
      %p154 = scmp.ne.s32.totalorder %s145, %s146
      %p155 = scmp.eq.s32.totalorder %s25, 0
      %p156 = por %p154, %p155
      %p157 = scmp.ne.s32.totalorder %s145, %s146
      %p158 = scmp.eq.s32.totalorder %s26, 1
      %p159 = por %p157, %p158
      %p161 = scmp.ne.s32.totalorder %s146, %s160
      %p162 = scmp.eq.s32.totalorder %s26, 0
      %p163 = por %p161, %p162
      %s165 = sadd.s32 %s164, 1
      %p168 = scmp.eq.s32.totalorder %s20, 1
      %p169 = scmp.ne.s32.totalorder %s164, %s166
      %p170 = scmp.eq.s32.totalorder %s20, 0
      %p171 = por %p169, %p170
      %p172 = scmp.ne.s32.totalorder %s164, %s166
      %p173 = scmp.eq.s32.totalorder %s25, 1
      %p174 = por %p172, %p173
      %p175 = scmp.ne.s32.totalorder %s166, %s167
      %p176 = scmp.eq.s32.totalorder %s25, 0
      %p177 = por %p175, %p176
      %p178 = scmp.ne.s32.totalorder %s166, %s167
      %p179 = scmp.eq.s32.totalorder %s26, 1
      %p180 = por %p178, %p179
      %p182 = scmp.ne.s32.totalorder %s167, %s181
      %p183 = scmp.eq.s32.totalorder %s26, 0
      %p184 = por %p182, %p183
      %s186 = sadd.s32 %s185, 1
      %p189 = scmp.eq.s32.totalorder %s20, 1
      %p190 = scmp.ne.s32.totalorder %s185, %s187
      %p191 = scmp.eq.s32.totalorder %s20, 0
      %p192 = por %p190, %p191
      %p193 = scmp.ne.s32.totalorder %s185, %s187
      %p194 = scmp.eq.s32.totalorder %s25, 1
      %p195 = por %p193, %p194
      %p196 = scmp.ne.s32.totalorder %s187, %s188
      %p197 = scmp.eq.s32.totalorder %s25, 0
      %p198 = por %p196, %p197
      %p199 = scmp.ne.s32.totalorder %s187, %s188
      %p200 = scmp.eq.s32.totalorder %s26, 1
      %p201 = por %p199, %p200
      %p203 = scmp.ne.s32.totalorder %s188, %s202
      %p204 = scmp.eq.s32.totalorder %s26, 0
      %p205 = por %p203, %p204
      %s207 = sadd.s32 %s206, 1
      %p210 = scmp.eq.s32.totalorder %s20, 1
      %p211 = scmp.ne.s32.totalorder %s206, %s208
      %p212 = scmp.eq.s32.totalorder %s20, 0
      %p213 = por %p211, %p212
      %p214 = scmp.ne.s32.totalorder %s206, %s208
      %p215 = scmp.eq.s32.totalorder %s25, 1
      %p216 = por %p214, %p215
      %p217 = scmp.ne.s32.totalorder %s208, %s209
      %p218 = scmp.eq.s32.totalorder %s25, 0
      %p219 = por %p217, %p218
      %p220 = scmp.ne.s32.totalorder %s208, %s209
      %p221 = scmp.eq.s32.totalorder %s26, 1
      %p222 = por %p220, %p221
      %p224 = scmp.ne.s32.totalorder %s209, %s223
      %p225 = scmp.eq.s32.totalorder %s26, 0
      %p226 = por %p224, %p225
      %p227 = scmp.le.s32.totalorder 1, %s20
      %p228 = scmp.lt.s32.totalorder %s20, 3
      %p229 = pnand %p227, %p228
      %p230 = pneg %p229
      // Predicated region
      $region9: #{tpu_custom_call.1} parent=5 // pred_check
        _
      $region10: #{tpu_custom_call.1} parent=5 // pred_check_branch
        %232 = sbr.rel (%p229) target = $region12
      $region11: #{tpu_custom_call.1} parent=5 // pred_region
        %s233 = ssub.s32 %s20, 1
        // Predicated region
        $region13: #{tpu_custom_call.1} parent=11 // pred_check
          %p234 = pneg %p67
        $region14: #{tpu_custom_call.1} parent=11 // pred_check_branch
          %236 = sbr.rel (%p234) target = $region16
        $region15: #{tpu_custom_call.1} parent=11 // pred_region
          %s238 = ssub.s32 2048, 2048
          %239 = vsyncadd [#allocation7], %s238
          %s240 = sshll.u32 [#allocation6], 4
          %s241 = int_to_ptr.vmem [resolvable:$true] %s240
          %246 = dma.hbm_to_vmem [thread:$0]  %s1, 2048, %s241, [#allocation7], 64, 64, 4
        $region16: #{tpu_custom_call.1} parent=11 // pred_fallthru
          _
        // Predicated region
        $region17: #{tpu_custom_call.1} parent=11 // pred_check
          %p247 = pneg %p88
        $region18: #{tpu_custom_call.1} parent=11 // pred_check_branch
          %249 = sbr.rel (%p247) target = $region20
        $region19: #{tpu_custom_call.1} parent=11 // pred_region
          %s251 = ssub.s32 1024, 1024
          %252 = vsyncadd [#allocation7], %s251
          %s253 = sshll.u32 [#allocation8], 4
          %s254 = int_to_ptr.vmem [resolvable:$true] %s253
          %259 = dma.hbm_to_vmem [thread:$0]  %s2, 1024, %s254, [#allocation7], 64, 64, 4
        $region20: #{tpu_custom_call.1} parent=11 // pred_fallthru
          _
        // Predicated region
        $region21: #{tpu_custom_call.1} parent=11 // pred_check
          %p260 = pneg %p109
        $region22: #{tpu_custom_call.1} parent=11 // pred_check_branch
          %262 = sbr.rel (%p260) target = $region24
        $region23: #{tpu_custom_call.1} parent=11 // pred_region
          _
        $region24: #{tpu_custom_call.1} parent=11 // pred_fallthru
          _
        // Predicated region
        $region25: #{tpu_custom_call.1} parent=11 // pred_check
          %p263 = pneg %p156
        $region26: #{tpu_custom_call.1} parent=11 // pred_check_branch
          %265 = sbr.rel (%p263) target = $region28
        $region27: #{tpu_custom_call.1} parent=11 // pred_region
          _
        $region28: #{tpu_custom_call.1} parent=11 // pred_fallthru
          _
        // Predicated region
        $region29: #{tpu_custom_call.1} parent=11 // pred_check
          %p266 = pneg %p177
        $region30: #{tpu_custom_call.1} parent=11 // pred_check_branch
          %268 = sbr.rel (%p266) target = $region32
        $region31: #{tpu_custom_call.1} parent=11 // pred_region
          %s270 = ssub.s32 1024, 1024
          %271 = vsyncadd [#allocation10], %s270
          %s272 = sshll.u32 [#allocation9], 4
          %s273 = int_to_ptr.vmem [resolvable:$true] %s272
          %278 = dma.hbm_to_vmem [thread:$0]  %s6, 1024, %s273, [#allocation10], 64, 64, 4
        $region32: #{tpu_custom_call.1} parent=11 // pred_fallthru
          _
        // Predicated region
        $region33: #{tpu_custom_call.1} parent=11 // pred_check
          %p279 = pneg %p198
        $region34: #{tpu_custom_call.1} parent=11 // pred_check_branch
          %281 = sbr.rel (%p279) target = $region36
        $region35: #{tpu_custom_call.1} parent=11 // pred_region
          _
        $region36: #{tpu_custom_call.1} parent=11 // pred_fallthru
          _
      $region12: #{tpu_custom_call.1} parent=5 // pred_fallthru
        _
      %p282 = scmp.lt.s32.totalorder %s20, 2
      // Predicated region
      $region37: #{tpu_custom_call.1} parent=5 // pred_check
        %p283 = pneg %p282
      $region38: #{tpu_custom_call.1} parent=5 // pred_check_branch
        %285 = sbr.rel (%p283) target = $region40
      $region39: #{tpu_custom_call.1} parent=5 // pred_region
        // Predicated region
        $region41: #{tpu_custom_call.1} parent=39 // pred_check
          %p286 = pneg %p40
        $region42: #{tpu_custom_call.1} parent=39 // pred_check_branch
          %288 = sbr.rel (%p286) target = $region44
        $region43: #{tpu_custom_call.1} parent=39 // pred_region
          %s289 = sand.u32 %s30, 1
          %s290 = scalar_lea.sflag [#allocation4], %s289
          %s291 = sand.u32 %s30, 1
          %s292 = smul.addr %s291, 128
          %s293 = scalar_lea.vmem [#allocation3], %s292
          %s294 = smul.u32 16, %s20
          %s296 = ssub.s32 2048, 2048
          %297 = vsyncadd %s290, %s296
          %s298 = smul.addr %s294, 2
          %s299 = smul.addr %s298, 64
          %s300 = scalar_lea.hbm %s0, %s299
          %s301 = sshll.u32 %s293, 4
          %s302 = int_to_ptr.vmem [resolvable:$true] %s301
          %307 = dma.hbm_to_vmem [thread:$0]  %s300, 2048, %s302, %s290, 128, 128, 8
        $region44: #{tpu_custom_call.1} parent=39 // pred_fallthru
          _
        // Predicated region
        $region45: #{tpu_custom_call.1} parent=39 // pred_check
          %p308 = pneg %p129
        $region46: #{tpu_custom_call.1} parent=39 // pred_check_branch
          %310 = sbr.rel (%p308) target = $region48
        $region47: #{tpu_custom_call.1} parent=39 // pred_region
          %p311 = scmp.lt.s32.totalorder %s20, 1
          %s312 = scalar_select %p311, %s20, 1
          %s313 = smul.addr %s312, 4
          %s314 = scalar_lea.vmem %s4, %s313
        $region48: #{tpu_custom_call.1} parent=39 // pred_fallthru
          _
      $region40: #{tpu_custom_call.1} parent=5 // pred_fallthru
        _
      %p315 = scmp.le.s32.totalorder 1, %s20
      %p316 = scmp.lt.s32.totalorder %s20, 3
      %p317 = pnand %p315, %p316
      %p318 = pneg %p317
      // Predicated region
      $region49: #{tpu_custom_call.1} parent=5 // pred_check
        _
      $region50: #{tpu_custom_call.1} parent=5 // pred_check_branch
        %320 = sbr.rel (%p317) target = $region52
      $region51: #{tpu_custom_call.1} parent=5 // pred_region
        %s321 = ssub.s32 %s20, 1
        %s322 = sand.u32 %s33, 1
        %s323 = scalar_lea.sflag [#allocation4], %s322
        %s324 = sand.u32 %s33, 1
        %s325 = smul.addr %s324, 128
        %s326 = scalar_lea.vmem [#allocation3], %s325
        // Predicated region
        $region53: #{tpu_custom_call.1} parent=51 // pred_check
          %p327 = pneg %p46
        $region54: #{tpu_custom_call.1} parent=51 // pred_check_branch
          %329 = sbr.rel (%p327) target = $region56
        $region55: #{tpu_custom_call.1} parent=51 // pred_region
          %330 = dma.done %s323, 2048
        $region56: #{tpu_custom_call.1} parent=51 // pred_fallthru
          _
        // Predicated region
        $region57: #{tpu_custom_call.1} parent=51 // pred_check
          %p331 = pneg %p67
        $region58: #{tpu_custom_call.1} parent=51 // pred_check_branch
          %333 = sbr.rel (%p331) target = $region60
        $region59: #{tpu_custom_call.1} parent=51 // pred_region
          %334 = dma.done [#allocation7], 2048
        $region60: #{tpu_custom_call.1} parent=51 // pred_fallthru
          _
        // Predicated region
        $region61: #{tpu_custom_call.1} parent=51 // pred_check
          %p335 = pneg %p88
        $region62: #{tpu_custom_call.1} parent=51 // pred_check_branch
          %337 = sbr.rel (%p335) target = $region64
        $region63: #{tpu_custom_call.1} parent=51 // pred_region
          %338 = dma.done [#allocation7], 1024
        $region64: #{tpu_custom_call.1} parent=51 // pred_fallthru
          _
        // Predicated region
        $region65: #{tpu_custom_call.1} parent=51 // pred_check
          %p339 = pneg %p177
        $region66: #{tpu_custom_call.1} parent=51 // pred_check_branch
          %341 = sbr.rel (%p339) target = $region68
        $region67: #{tpu_custom_call.1} parent=51 // pred_region
          %342 = dma.done [#allocation10], 1024
        $region68: #{tpu_custom_call.1} parent=51 // pred_fallthru
          _
        %s343 = sand.u32 %s33, 1
        %s344 = scalar_lea.sflag [#allocation4], %s343
        %s345 = sand.u32 %s33, 1
        %s346 = smul.addr %s345, 128
        %s347 = scalar_lea.vmem [#allocation3], %s346
        %p348 = pneg %p46
        %p349 = pneg %p43
        %p350 = pneg %p67
        %p351 = pneg %p64
        %p352 = pneg %p88
        %p353 = pneg %p85
        %p354 = pneg %p109
        %p355 = pneg %p106
        %p356 = scmp.lt.s32.totalorder %s25, 1
        %s357 = scalar_select %p356, %s25, 1
        %s358 = smul.addr %s357, 4
        %s359 = scalar_lea.vmem %s4, %s358
        %p360 = pneg %p135
        %p361 = pneg %p132
        %p362 = pneg %p156
        %p363 = pneg %p153
        %p364 = pneg %p177
        %p365 = pneg %p174
        %p366 = pneg %p198
        %p367 = pneg %p195
        %p368 = pneg %p219
        %p369 = pneg %p216
        %s370 = smul.u32 16, %s25
        %p371 = scmp.lt.s32.totalorder %s25, 1
        %s372 = scalar_select %p371, %s25, 1
        %s373 = smul.addr %s372, 4
        %s374 = scalar_lea.vmem %s4, %s373
        %p376 = scmp.eq.s32.totalorder %s25, 0
        // Predicated region
        $region69: #{tpu_custom_call.1} parent=51 // pred_check
          %p377 = pneg %p376
        $region70: #{tpu_custom_call.1} parent=51 // pred_check_branch
          %379 = sbr.rel (%p377) target = $region72
        $region71: #{tpu_custom_call.1} parent=51 // pred_region
          %380 = vst [vmem:[#allocation2] sm:$0xff] 0.0
        $region72: #{tpu_custom_call.1} parent=51 // pred_fallthru
          _
        %v381 = vld [vmem:[%s326] sm:$0xff]
        %v382 = vld [vmem:[%s326 + $0x8] sm:$0xff]
        %v383 = vld [vmem:[%s326 + $0x10] sm:$0xff]
        %v384 = vld [vmem:[%s326 + $0x18] sm:$0xff]
        %v385 = vld [vmem:[%s326 + $0x20] sm:$0xff]
        %v386 = vld [vmem:[%s326 + $0x28] sm:$0xff]
        %v387 = vld [vmem:[%s326 + $0x30] sm:$0xff]
        %v388 = vld [vmem:[%s326 + $0x38] sm:$0xff]
        %v389 = vld [vmem:[%s326 + $0x40] sm:$0xff]
        %v390 = vld [vmem:[%s326 + $0x48] sm:$0xff]
        %v391 = vld [vmem:[%s326 + $0x50] sm:$0xff]
        %v392 = vld [vmem:[%s326 + $0x58] sm:$0xff]
        %v393 = vld [vmem:[%s326 + $0x60] sm:$0xff]
        %v394 = vld [vmem:[%s326 + $0x68] sm:$0xff]
        %v395 = vld [vmem:[%s326 + $0x70] sm:$0xff]
        %v396 = vld [vmem:[%s326 + $0x78] sm:$0xff]
        %v397 = vld [vmem:[#allocation6] sm:$0xf]
        %v398 = vld [vmem:[#allocation6 + $0x4] sm:$0xf]
        %v399 = vld [vmem:[#allocation6 + $0x8] sm:$0xf]
        %v400 = vld [vmem:[#allocation6 + $0xc] sm:$0xf]
        %v401 = vld [vmem:[#allocation6 + $0x10] sm:$0xf]
        %v402 = vld [vmem:[#allocation6 + $0x14] sm:$0xf]
        %v403 = vld [vmem:[#allocation6 + $0x18] sm:$0xf]
        %v404 = vld [vmem:[#allocation6 + $0x1c] sm:$0xf]
        %v405 = vld [vmem:[#allocation6 + $0x20] sm:$0xf]
        %v406 = vld [vmem:[#allocation6 + $0x24] sm:$0xf]
        %v407 = vld [vmem:[#allocation6 + $0x28] sm:$0xf]
        %v408 = vld [vmem:[#allocation6 + $0x2c] sm:$0xf]
        %v409 = vld [vmem:[#allocation6 + $0x30] sm:$0xf]
        %v410 = vld [vmem:[#allocation6 + $0x34] sm:$0xf]
        %v411 = vld [vmem:[#allocation6 + $0x38] sm:$0xf]
        %v412 = vld [vmem:[#allocation6 + $0x3c] sm:$0xf]
        %v413 = vld [vmem:[#allocation6 + $0x40] sm:$0xf]
        %v414 = vld [vmem:[#allocation6 + $0x44] sm:$0xf]
        %v415 = vld [vmem:[#allocation6 + $0x48] sm:$0xf]
        %v416 = vld [vmem:[#allocation6 + $0x4c] sm:$0xf]
        %v417 = vld [vmem:[#allocation6 + $0x50] sm:$0xf]
        %v418 = vld [vmem:[#allocation6 + $0x54] sm:$0xf]
        %v419 = vld [vmem:[#allocation6 + $0x58] sm:$0xf]
        %v420 = vld [vmem:[#allocation6 + $0x5c] sm:$0xf]
        %v421 = vld [vmem:[#allocation6 + $0x60] sm:$0xf]
        %v422 = vld [vmem:[#allocation6 + $0x64] sm:$0xf]
        %v423 = vld [vmem:[#allocation6 + $0x68] sm:$0xf]
        %v424 = vld [vmem:[#allocation6 + $0x6c] sm:$0xf]
        %v425 = vld [vmem:[#allocation6 + $0x70] sm:$0xf]
        %v426 = vld [vmem:[#allocation6 + $0x74] sm:$0xf]
        %v427 = vld [vmem:[#allocation6 + $0x78] sm:$0xf]
        %v428 = vld [vmem:[#allocation6 + $0x7c] sm:$0xf]
        %v445 = vunpack.c.l.b16 %v381
        %v446 = vunpack.c.h.b16 %v381
        %v447 = vunpack.c.l.b16 %v382
        %v448 = vunpack.c.h.b16 %v382
        %v449 = vunpack.c.l.b16 %v383
        %v450 = vunpack.c.h.b16 %v383
        %v451 = vunpack.c.l.b16 %v384
        %v452 = vunpack.c.h.b16 %v384
        %v453 = vunpack.c.l.b16 %v385
        %v454 = vunpack.c.h.b16 %v385
        %v455 = vunpack.c.l.b16 %v386
        %v456 = vunpack.c.h.b16 %v386
        %v457 = vunpack.c.l.b16 %v387
        %v458 = vunpack.c.h.b16 %v387
        %v459 = vunpack.c.l.b16 %v388
        %v460 = vunpack.c.h.b16 %v388
        %v461 = vunpack.c.l.b16 %v389
        %v462 = vunpack.c.h.b16 %v389
        %v463 = vunpack.c.l.b16 %v390
        %v464 = vunpack.c.h.b16 %v390
        %v465 = vunpack.c.l.b16 %v391
        %v466 = vunpack.c.h.b16 %v391
        %v467 = vunpack.c.l.b16 %v392
        %v468 = vunpack.c.h.b16 %v392
        %v469 = vunpack.c.l.b16 %v393
        %v470 = vunpack.c.h.b16 %v393
        %v471 = vunpack.c.l.b16 %v394
        %v472 = vunpack.c.h.b16 %v394
        %v473 = vunpack.c.l.b16 %v395
        %v474 = vunpack.c.h.b16 %v395
        %v475 = vunpack.c.l.b16 %v396
        %v476 = vunpack.c.h.b16 %v396
        %v477 = vpack.c.b16 %v447, %v445
        %v478 = vpack.c.b16 %v448, %v446
        %v479 = vpack.c.b16 %v451, %v449
        %v480 = vpack.c.b16 %v452, %v450
        %v481 = vpack.c.b16 %v455, %v453
        %v482 = vpack.c.b16 %v456, %v454
        %v483 = vpack.c.b16 %v459, %v457
        %v484 = vpack.c.b16 %v460, %v458
        %v485 = vpack.c.b16 %v463, %v461
        %v486 = vpack.c.b16 %v464, %v462
        %v487 = vpack.c.b16 %v467, %v465
        %v488 = vpack.c.b16 %v468, %v466
        %v489 = vpack.c.b16 %v471, %v469
        %v490 = vpack.c.b16 %v472, %v470
        %v491 = vpack.c.b16 %v475, %v473
        %v492 = vpack.c.b16 %v476, %v474
        %v541 = vunpack.c.l.b16 %v397
        %v542 = vunpack.c.l.b16 %v398
        %v543 = vunpack.c.l.b16 %v399
        %v544 = vunpack.c.l.b16 %v400
        %v545 = vunpack.c.l.b16 %v401
        %v546 = vunpack.c.l.b16 %v402
        %v547 = vunpack.c.l.b16 %v403
        %v548 = vunpack.c.l.b16 %v404
        %v549 = vunpack.c.l.b16 %v405
        %v550 = vunpack.c.l.b16 %v406
        %v551 = vunpack.c.l.b16 %v407
        %v552 = vunpack.c.l.b16 %v408
        %v553 = vunpack.c.l.b16 %v409
        %v554 = vunpack.c.l.b16 %v410
        %v555 = vunpack.c.l.b16 %v411
        %v556 = vunpack.c.l.b16 %v412
        %v557 = vunpack.c.l.b16 %v413
        %v558 = vunpack.c.l.b16 %v414
        %v559 = vunpack.c.l.b16 %v415
        %v560 = vunpack.c.l.b16 %v416
        %v561 = vunpack.c.l.b16 %v417
        %v562 = vunpack.c.l.b16 %v418
        %v563 = vunpack.c.l.b16 %v419
        %v564 = vunpack.c.l.b16 %v420
        %v565 = vunpack.c.l.b16 %v421
        %v566 = vunpack.c.l.b16 %v422
        %v567 = vunpack.c.l.b16 %v423
        %v568 = vunpack.c.l.b16 %v424
        %v569 = vunpack.c.l.b16 %v425
        %v570 = vunpack.c.l.b16 %v426
        %v571 = vunpack.c.l.b16 %v427
        %v572 = vunpack.c.l.b16 %v428
        %v573 = vpack.c.b16 %v542, %v541
        %v574 = vpack.c.b16 %v544, %v543
        %v575 = vpack.c.b16 %v546, %v545
        %v576 = vpack.c.b16 %v548, %v547
        %v577 = vpack.c.b16 %v550, %v549
        %v578 = vpack.c.b16 %v552, %v551
        %v579 = vpack.c.b16 %v554, %v553
        %v580 = vpack.c.b16 %v556, %v555
        %v581 = vpack.c.b16 %v558, %v557
        %v582 = vpack.c.b16 %v560, %v559
        %v583 = vpack.c.b16 %v562, %v561
        %v584 = vpack.c.b16 %v564, %v563
        %v585 = vpack.c.b16 %v566, %v565
        %v586 = vpack.c.b16 %v568, %v567
        %v587 = vpack.c.b16 %v570, %v569
        %v588 = vpack.c.b16 %v572, %v571
        %605 = vmatprep.subr.bf16.mxu0 0
        %606 = vmatpush1.bf16.msra.mxu0 %v573
        %607 = vmatprep.subr.bf16.mxu0 0
        %608 = vmatpush1.bf16.msra.mxu0 %v574
        %609 = vmatprep.subr.bf16.mxu0 0
        %610 = vmatpush1.bf16.msra.mxu0 %v575
        %611 = vmatprep.subr.bf16.mxu0 0
        %612 = vmatpush1.bf16.msra.mxu0 %v576
        %613 = vmatprep.subr.bf16.mxu0 0
        %614 = vmatpush1.bf16.msra.mxu0 %v577
        %615 = vmatprep.subr.bf16.mxu0 0
        %616 = vmatpush1.bf16.msra.mxu0 %v578
        %617 = vmatprep.subr.bf16.mxu0 0
        %618 = vmatpush1.bf16.msra.mxu0 %v579
        %619 = vmatprep.subr.bf16.mxu0 0
        %620 = vmatpush1.bf16.msra.mxu0 %v580
        %621 = vmatprep.subr.bf16.mxu0 0
        %622 = vmatpush1.bf16.msra.mxu0 %v581
        %623 = vmatprep.subr.bf16.mxu0 0
        %624 = vmatpush1.bf16.msra.mxu0 %v582
        %625 = vmatprep.subr.bf16.mxu0 0
        %626 = vmatpush1.bf16.msra.mxu0 %v583
        %627 = vmatprep.subr.bf16.mxu0 0
        %628 = vmatpush1.bf16.msra.mxu0 %v584
        %629 = vmatprep.subr.bf16.mxu0 0
        %630 = vmatpush1.bf16.msra.mxu0 %v585
        %631 = vmatprep.subr.bf16.mxu0 0
        %632 = vmatpush1.bf16.msra.mxu0 %v586
        %633 = vmatprep.subr.bf16.mxu0 0
        %634 = vmatpush1.bf16.msra.mxu0 %v587
        %635 = vmatprep.subr.bf16.mxu0 0
        %636 = vmatpush1.bf16.msra.mxu0 %v588
        %637 = vmatprep.mubr.bf16.mxu0 %v478
        %638 = vmatmul.mubr.bf16.gmra.mrb[0].mxu0 %v477
        %v639 = vpop.f32.mrb[0].mxu0
        %v640 = vadd.f32 0.0, %v639
        %v641 = vpop.f32.mrb[0].mxu0
        %v642 = vpop.f32.mrb[0].mxu0
        %v643 = vadd.f32 0.0, %v642
        %v644 = vpop.f32.mrb[0].mxu0
        %645 = vmatprep.mubr.bf16.mxu0 %v480
        %646 = vmatmul.mubr.bf16.gmra.mrb[0].mxu0 %v479
        %v647 = vpop.f32.mrb[0].mxu0
        %v648 = vadd.f32 0.0, %v647
        %v649 = vpop.f32.mrb[0].mxu0
        %v650 = vpop.f32.mrb[0].mxu0
        %v651 = vadd.f32 0.0, %v650
        %v652 = vpop.f32.mrb[0].mxu0
        %653 = vmatprep.mubr.bf16.mxu0 %v482
        %654 = vmatmul.mubr.bf16.gmra.mrb[0].mxu0 %v481
        %v655 = vpop.f32.mrb[0].mxu0
        %v656 = vadd.f32 0.0, %v655
        %v657 = vpop.f32.mrb[0].mxu0
        %v658 = vpop.f32.mrb[0].mxu0
        %v659 = vadd.f32 0.0, %v658
        %v660 = vpop.f32.mrb[0].mxu0
        %661 = vmatprep.mubr.bf16.mxu0 %v484
        %662 = vmatmul.mubr.bf16.gmra.mrb[0].mxu0 %v483
        %v663 = vpop.f32.mrb[0].mxu0
        %v664 = vadd.f32 0.0, %v663
        %v665 = vpop.f32.mrb[0].mxu0
        %v666 = vpop.f32.mrb[0].mxu0
        %v667 = vadd.f32 0.0, %v666
        %v668 = vpop.f32.mrb[0].mxu0
        %669 = vmatprep.mubr.bf16.mxu0 %v486
        %670 = vmatmul.mubr.bf16.gmra.mrb[0].mxu0 %v485
        %v671 = vpop.f32.mrb[0].mxu0
        %v672 = vadd.f32 0.0, %v671
        %v673 = vpop.f32.mrb[0].mxu0
        %v674 = vpop.f32.mrb[0].mxu0
        %v675 = vadd.f32 0.0, %v674
        %v676 = vpop.f32.mrb[0].mxu0
        %677 = vmatprep.mubr.bf16.mxu0 %v488
        %678 = vmatmul.mubr.bf16.gmra.mrb[0].mxu0 %v487
        %v679 = vpop.f32.mrb[0].mxu0
        %v680 = vadd.f32 0.0, %v679
        %v681 = vpop.f32.mrb[0].mxu0
        %v682 = vpop.f32.mrb[0].mxu0
        %v683 = vadd.f32 0.0, %v682
        %v684 = vpop.f32.mrb[0].mxu0
        %685 = vmatprep.mubr.bf16.mxu0 %v490
        %686 = vmatmul.mubr.bf16.gmra.mrb[0].mxu0 %v489
        %v687 = vpop.f32.mrb[0].mxu0
        %v688 = vadd.f32 0.0, %v687
        %v689 = vpop.f32.mrb[0].mxu0
        %v690 = vpop.f32.mrb[0].mxu0
        %v691 = vadd.f32 0.0, %v690
        %v692 = vpop.f32.mrb[0].mxu0
        %693 = vmatprep.mubr.bf16.mxu0 %v492
        %694 = vmatmul.mubr.bf16.gmra.mrb[0].mxu0 %v491
        %v695 = vpop.f32.mrb[0].mxu0
        %v696 = vadd.f32 0.0, %v695
        %v697 = vpop.f32.mrb[0].mxu0
        %v698 = vpop.f32.mrb[0].mxu0
        %v699 = vadd.f32 0.0, %v698
        %v700 = vpop.f32.mrb[0].mxu0
        %701 = vdwg.mxu0
        %v702 = vpack.c.bf16 %v643, %v640
        %v703 = vpack.c.bf16 %v651, %v648
        %v704 = vpack.c.bf16 %v659, %v656
        %v705 = vpack.c.bf16 %v667, %v664
        %v706 = vpack.c.bf16 %v675, %v672
        %v707 = vpack.c.bf16 %v683, %v680
        %v708 = vpack.c.bf16 %v691, %v688
        %v709 = vpack.c.bf16 %v699, %v696
        %v710 = vld [vmem:[#allocation8] sm:$0xf]
        %v711 = vld [vmem:[#allocation8 + $0x4] sm:$0xf]
        %v712 = vld [vmem:[#allocation8 + $0x8] sm:$0xf]
        %v713 = vld [vmem:[#allocation8 + $0xc] sm:$0xf]
        %v714 = vld [vmem:[#allocation8 + $0x10] sm:$0xf]
        %v715 = vld [vmem:[#allocation8 + $0x14] sm:$0xf]
        %v716 = vld [vmem:[#allocation8 + $0x18] sm:$0xf]
        %v717 = vld [vmem:[#allocation8 + $0x1c] sm:$0xf]
        %v718 = vld [vmem:[#allocation8 + $0x20] sm:$0xf]
        %v719 = vld [vmem:[#allocation8 + $0x24] sm:$0xf]
        %v720 = vld [vmem:[#allocation8 + $0x28] sm:$0xf]
        %v721 = vld [vmem:[#allocation8 + $0x2c] sm:$0xf]
        %v722 = vld [vmem:[#allocation8 + $0x30] sm:$0xf]
        %v723 = vld [vmem:[#allocation8 + $0x34] sm:$0xf]
        %v724 = vld [vmem:[#allocation8 + $0x38] sm:$0xf]
        %v725 = vld [vmem:[#allocation8 + $0x3c] sm:$0xf]
        %v726 = vld [vmem:[%s3] sm:$0x1]
        %v728 = vlaneseq
        %v729 = vshrl.u32 %v728, 7
        %v730 = vsub.s32 0, %v729
        %v731 = vrot.slane %v726, %v730
        %v749 = vunpack.c.l.b16 %v710
        %v750 = vunpack.c.l.b16 %v711
        %v751 = vunpack.c.l.b16 %v712
        %v752 = vunpack.c.l.b16 %v713
        %v753 = vunpack.c.l.b16 %v714
        %v754 = vunpack.c.l.b16 %v715
        %v755 = vunpack.c.l.b16 %v716
        %v756 = vunpack.c.l.b16 %v717
        %v757 = vunpack.c.l.b16 %v718
        %v758 = vunpack.c.l.b16 %v719
        %v759 = vunpack.c.l.b16 %v720
        %v760 = vunpack.c.l.b16 %v721
        %v761 = vunpack.c.l.b16 %v722
        %v762 = vunpack.c.l.b16 %v723
        %v763 = vunpack.c.l.b16 %v724
        %v764 = vunpack.c.l.b16 %v725
        %v765 = vpack.c.b16 %v750, %v749
        %v766 = vpack.c.b16 %v752, %v751
        %v767 = vpack.c.b16 %v754, %v753
        %v768 = vpack.c.b16 %v756, %v755
        %v769 = vpack.c.b16 %v758, %v757
        %v770 = vpack.c.b16 %v760, %v759
        %v771 = vpack.c.b16 %v762, %v761
        %v772 = vpack.c.b16 %v764, %v763
        %781 = vmatprep.subr.bf16.mxu0 0
        %782 = vmatpush1.bf16.msra.mxu0 %v765
        %783 = vmatprep.subr.bf16.mxu0 0
        %784 = vmatpush1.bf16.msra.mxu0 %v766
        %785 = vmatprep.subr.bf16.mxu0 0
        %786 = vmatpush1.bf16.msra.mxu0 %v767
        %787 = vmatprep.subr.bf16.mxu0 0
        %788 = vmatpush1.bf16.msra.mxu0 %v768
        %789 = vmatprep.subr.bf16.mxu0 0
        %790 = vmatpush1.bf16.msra.mxu0 %v769
        %791 = vmatprep.subr.bf16.mxu0 0
        %792 = vmatpush1.bf16.msra.mxu0 %v770
        %793 = vmatprep.subr.bf16.mxu0 0
        %794 = vmatpush1.bf16.msra.mxu0 %v771
        %795 = vmatprep.subr.bf16.mxu0 0
        %796 = vmatpush1.bf16.msra.mxu0 %v772
        %797 = vmatprep.subr.bf16.mxu0 0
        %798 = vmatpush1.bf16.msra.mxu0 0
        %799 = vmatprep.subr.bf16.mxu0 0
        %800 = vmatpush1.bf16.msra.mxu0 0
        %801 = vmatprep.subr.bf16.mxu0 0
        %802 = vmatpush1.bf16.msra.mxu0 0
        %803 = vmatprep.subr.bf16.mxu0 0
        %804 = vmatpush1.bf16.msra.mxu0 0
        %805 = vmatprep.subr.bf16.mxu0 0
        %806 = vmatpush1.bf16.msra.mxu0 0
        %807 = vmatprep.subr.bf16.mxu0 0
        %808 = vmatpush1.bf16.msra.mxu0 0
        %809 = vmatprep.subr.bf16.mxu0 0
        %810 = vmatpush1.bf16.msra.mxu0 0
        %811 = vmatprep.subr.bf16.mxu0 0
        %812 = vmatpush1.bf16.msra.mxu0 0
        %813 = vmatprep.mubr.bf16.mxu0 0
        %814 = vmatmul.mubr.bf16.gmra.mrb[0].mxu0 %v702
        %v815 = vpop.f32.mrb[0].mxu0
        %v816 = vadd.f32 %v731, %v815
        %v817 = vpop.f32.mrb[0].mxu0
        %v818 = vpop.f32.mrb[0].mxu0
        %v819 = vadd.f32 %v731, %v818
        %v820 = vpop.f32.mrb[0].mxu0
        %821 = vmatprep.mubr.bf16.mxu0 0
        %822 = vmatmul.mubr.bf16.gmra.mrb[0].mxu0 %v703
        %v823 = vpop.f32.mrb[0].mxu0
        %v824 = vadd.f32 %v731, %v823
        %v825 = vpop.f32.mrb[0].mxu0
        %v826 = vpop.f32.mrb[0].mxu0
        %v827 = vadd.f32 %v731, %v826
        %v828 = vpop.f32.mrb[0].mxu0
        %829 = vmatprep.mubr.bf16.mxu0 0
        %830 = vmatmul.mubr.bf16.gmra.mrb[0].mxu0 %v704
        %v831 = vpop.f32.mrb[0].mxu0
        %v832 = vadd.f32 %v731, %v831
        %v833 = vpop.f32.mrb[0].mxu0
        %v834 = vpop.f32.mrb[0].mxu0
        %v835 = vadd.f32 %v731, %v834
        %v836 = vpop.f32.mrb[0].mxu0
        %837 = vmatprep.mubr.bf16.mxu0 0
        %838 = vmatmul.mubr.bf16.gmra.mrb[0].mxu0 %v705
        %v839 = vpop.f32.mrb[0].mxu0
        %v840 = vadd.f32 %v731, %v839
        %v841 = vpop.f32.mrb[0].mxu0
        %v842 = vpop.f32.mrb[0].mxu0
        %v843 = vadd.f32 %v731, %v842
        %v844 = vpop.f32.mrb[0].mxu0
        %845 = vmatprep.mubr.bf16.mxu0 0
        %846 = vmatmul.mubr.bf16.gmra.mrb[0].mxu0 %v706
        %v847 = vpop.f32.mrb[0].mxu0
        %v848 = vadd.f32 %v731, %v847
        %v849 = vpop.f32.mrb[0].mxu0
        %v850 = vpop.f32.mrb[0].mxu0
        %v851 = vadd.f32 %v731, %v850
        %v852 = vpop.f32.mrb[0].mxu0
        %853 = vmatprep.mubr.bf16.mxu0 0
        %854 = vmatmul.mubr.bf16.gmra.mrb[0].mxu0 %v707
        %v855 = vpop.f32.mrb[0].mxu0
        %v856 = vadd.f32 %v731, %v855
        %v857 = vpop.f32.mrb[0].mxu0
        %v858 = vpop.f32.mrb[0].mxu0
        %v859 = vadd.f32 %v731, %v858
        %v860 = vpop.f32.mrb[0].mxu0
        %861 = vmatprep.mubr.bf16.mxu0 0
        %862 = vmatmul.mubr.bf16.gmra.mrb[0].mxu0 %v708
        %v863 = vpop.f32.mrb[0].mxu0
        %v864 = vadd.f32 %v731, %v863
        %v865 = vpop.f32.mrb[0].mxu0
        %v866 = vpop.f32.mrb[0].mxu0
        %v867 = vadd.f32 %v731, %v866
        %v868 = vpop.f32.mrb[0].mxu0
        %869 = vmatprep.mubr.bf16.mxu0 0
        %870 = vmatmul.mubr.bf16.gmra.mrb[0].mxu0 %v709
        %v871 = vpop.f32.mrb[0].mxu0
        %v872 = vadd.f32 %v731, %v871
        %v873 = vpop.f32.mrb[0].mxu0
        %v874 = vpop.f32.mrb[0].mxu0
        %v875 = vadd.f32 %v731, %v874
        %v876 = vpop.f32.mrb[0].mxu0
        %877 = vdwg.mxu0
        %v878 = vmax.f32 %v816, 0.0
        %v879 = vmax.f32 %v819, 0.0
        %v880 = vmax.f32 %v824, 0.0
        %v881 = vmax.f32 %v827, 0.0
        %v882 = vmax.f32 %v832, 0.0
        %v883 = vmax.f32 %v835, 0.0
        %v884 = vmax.f32 %v840, 0.0
        %v885 = vmax.f32 %v843, 0.0
        %v886 = vmax.f32 %v848, 0.0
        %v887 = vmax.f32 %v851, 0.0
        %v888 = vmax.f32 %v856, 0.0
        %v889 = vmax.f32 %v859, 0.0
        %v890 = vmax.f32 %v864, 0.0
        %v891 = vmax.f32 %v867, 0.0
        %v892 = vmax.f32 %v872, 0.0
        %v893 = vmax.f32 %v875, 0.0
        %v894 = vld [vmem:[#allocation2] sm:$0xff]
        %v895 = vld [vmem:[%s374] sm:$0xf]
        %v896 = vpack.c.bf16 %v879, %v878
        %v897 = vpack.c.bf16 %v881, %v880
        %v898 = vpack.c.bf16 %v883, %v882
        %v899 = vpack.c.bf16 %v885, %v884
        %v900 = vpack.c.bf16 %v887, %v886
        %v901 = vpack.c.bf16 %v889, %v888
        %v902 = vpack.c.bf16 %v891, %v890
        %v903 = vpack.c.bf16 %v893, %v892
        %904 = vmatprep.subr.bf16.mxu0 0
        %905 = vmatpush1.bf16.msra.mxu0 %v896
        %906 = vmatprep.subr.bf16.mxu0 0
        %907 = vmatpush1.bf16.msra.mxu0 %v897
        %908 = vmatprep.subr.bf16.mxu0 0
        %909 = vmatpush1.bf16.msra.mxu0 %v898
        %910 = vmatprep.subr.bf16.mxu0 0
        %911 = vmatpush1.bf16.msra.mxu0 %v899
        %912 = vmatprep.subr.bf16.mxu0 0
        %913 = vmatpush1.bf16.msra.mxu0 %v900
        %914 = vmatprep.subr.bf16.mxu0 0
        %915 = vmatpush1.bf16.msra.mxu0 %v901
        %916 = vmatprep.subr.bf16.mxu0 0
        %917 = vmatpush1.bf16.msra.mxu0 %v902
        %918 = vmatprep.subr.bf16.mxu0 0
        %919 = vmatpush1.bf16.msra.mxu0 %v903
        %920 = vmatprep.subr.bf16.mxu0 0
        %921 = vmatpush1.bf16.msra.mxu0 0
        %922 = vmatprep.subr.bf16.mxu0 0
        %923 = vmatpush1.bf16.msra.mxu0 0
        %924 = vmatprep.subr.bf16.mxu0 0
        %925 = vmatpush1.bf16.msra.mxu0 0
        %926 = vmatprep.subr.bf16.mxu0 0
        %927 = vmatpush1.bf16.msra.mxu0 0
        %928 = vmatprep.subr.bf16.mxu0 0
        %929 = vmatpush1.bf16.msra.mxu0 0
        %930 = vmatprep.subr.bf16.mxu0 0
        %931 = vmatpush1.bf16.msra.mxu0 0
        %932 = vmatprep.subr.bf16.mxu0 0
        %933 = vmatpush1.bf16.msra.mxu0 0
        %934 = vmatprep.subr.bf16.mxu0 0
        %935 = vmatpush1.bf16.msra.mxu0 0
        %936 = vmatprep.mubr.bf16.mxu0 0
        %937 = vmatmul.mubr.bf16.gmra.mrb[0].mxu0 %v895
        %v938 = vpop.f32.mrb[0].mxu0
        %v939 = vadd.f32 0.0, %v938
        %v940 = vpop.f32.mrb[0].mxu0
        %v941 = vpop.f32.mrb[0].mxu0
        %v942 = vpop.f32.mrb[0].mxu0
        %943 = vdwg.mxu0
        %v944 = vadd.f32 %v894, %v939
        %945 = vst [vmem:[#allocation2] sm:$0xff] %v944
        %p946 = scmp.eq.s32.totalorder %s25, 1
        // Predicated region
        $region73: #{tpu_custom_call.1} parent=51 // pred_check
          %p947 = pneg %p946
        $region74: #{tpu_custom_call.1} parent=51 // pred_check_branch
          %949 = sbr.rel (%p947) target = $region76
        $region75: #{tpu_custom_call.1} parent=51 // pred_region
          %v950 = vld [vmem:[#allocation2] sm:$0xff]
          %v951 = vld [vmem:[%s5] sm:$0xff]
          %953 = vset.pattern.permute.xlu0 0
          %954 = vperm.xlu0 %953, %v951
          %v955 = vpop.permute.xlu0 %954
          %v957 = vmul.f32 %v950, %v955
          %v958 = vpack.c.bf16 %v957, %v957
          %v959 = vld [vmem:[#allocation9] sm:$0xf]
          %v960 = vld [vmem:[#allocation9 + $0x4] sm:$0xf]
          %v961 = vld [vmem:[#allocation9 + $0x8] sm:$0xf]
          %v962 = vld [vmem:[#allocation9 + $0xc] sm:$0xf]
          %v963 = vld [vmem:[#allocation9 + $0x10] sm:$0xf]
          %v964 = vld [vmem:[#allocation9 + $0x14] sm:$0xf]
          %v965 = vld [vmem:[#allocation9 + $0x18] sm:$0xf]
          %v966 = vld [vmem:[#allocation9 + $0x1c] sm:$0xf]
          %v967 = vld [vmem:[#allocation9 + $0x20] sm:$0xf]
          %v968 = vld [vmem:[#allocation9 + $0x24] sm:$0xf]
          %v969 = vld [vmem:[#allocation9 + $0x28] sm:$0xf]
          %v970 = vld [vmem:[#allocation9 + $0x2c] sm:$0xf]
          %v971 = vld [vmem:[#allocation9 + $0x30] sm:$0xf]
          %v972 = vld [vmem:[#allocation9 + $0x34] sm:$0xf]
          %v973 = vld [vmem:[#allocation9 + $0x38] sm:$0xf]
          %v974 = vld [vmem:[#allocation9 + $0x3c] sm:$0xf]
          %v975 = vld [vmem:[%s7] sm:$0x1]
          %v977 = vlaneseq
          %v978 = vshrl.u32 %v977, 7
          %v979 = vsub.s32 0, %v978
          %v980 = vrot.slane %v975, %v979
          %v998 = vunpack.c.l.b16 %v959
          %v999 = vunpack.c.l.b16 %v960
          %v1000 = vunpack.c.l.b16 %v961
          %v1001 = vunpack.c.l.b16 %v962
          %v1002 = vunpack.c.l.b16 %v963
          %v1003 = vunpack.c.l.b16 %v964
          %v1004 = vunpack.c.l.b16 %v965
          %v1005 = vunpack.c.l.b16 %v966
          %v1006 = vunpack.c.l.b16 %v967
          %v1007 = vunpack.c.l.b16 %v968
          %v1008 = vunpack.c.l.b16 %v969
          %v1009 = vunpack.c.l.b16 %v970
          %v1010 = vunpack.c.l.b16 %v971
          %v1011 = vunpack.c.l.b16 %v972
          %v1012 = vunpack.c.l.b16 %v973
          %v1013 = vunpack.c.l.b16 %v974
          %v1014 = vpack.c.b16 %v999, %v998
          %v1015 = vpack.c.b16 %v1001, %v1000
          %v1016 = vpack.c.b16 %v1003, %v1002
          %v1017 = vpack.c.b16 %v1005, %v1004
          %v1018 = vpack.c.b16 %v1007, %v1006
          %v1019 = vpack.c.b16 %v1009, %v1008
          %v1020 = vpack.c.b16 %v1011, %v1010
          %v1021 = vpack.c.b16 %v1013, %v1012
          %1030 = vmatprep.subr.bf16.mxu0 0
          %1031 = vmatpush1.bf16.msra.mxu0 %v1014
          %1032 = vmatprep.subr.bf16.mxu0 0
          %1033 = vmatpush1.bf16.msra.mxu0 %v1015
          %1034 = vmatprep.subr.bf16.mxu0 0
          %1035 = vmatpush1.bf16.msra.mxu0 %v1016
          %1036 = vmatprep.subr.bf16.mxu0 0
          %1037 = vmatpush1.bf16.msra.mxu0 %v1017
          %1038 = vmatprep.subr.bf16.mxu0 0
          %1039 = vmatpush1.bf16.msra.mxu0 %v1018
          %1040 = vmatprep.subr.bf16.mxu0 0
          %1041 = vmatpush1.bf16.msra.mxu0 %v1019
          %1042 = vmatprep.subr.bf16.mxu0 0
          %1043 = vmatpush1.bf16.msra.mxu0 %v1020
          %1044 = vmatprep.subr.bf16.mxu0 0
          %1045 = vmatpush1.bf16.msra.mxu0 %v1021
          %1046 = vmatprep.subr.bf16.mxu0 0
          %1047 = vmatpush1.bf16.msra.mxu0 0
          %1048 = vmatprep.subr.bf16.mxu0 0
          %1049 = vmatpush1.bf16.msra.mxu0 0
          %1050 = vmatprep.subr.bf16.mxu0 0
          %1051 = vmatpush1.bf16.msra.mxu0 0
          %1052 = vmatprep.subr.bf16.mxu0 0
          %1053 = vmatpush1.bf16.msra.mxu0 0
          %1054 = vmatprep.subr.bf16.mxu0 0
          %1055 = vmatpush1.bf16.msra.mxu0 0
          %1056 = vmatprep.subr.bf16.mxu0 0
          %1057 = vmatpush1.bf16.msra.mxu0 0
          %1058 = vmatprep.subr.bf16.mxu0 0
          %1059 = vmatpush1.bf16.msra.mxu0 0
          %1060 = vmatprep.subr.bf16.mxu0 0
          %1061 = vmatpush1.bf16.msra.mxu0 0
          %1062 = vmatprep.mubr.bf16.mxu0 0
          %1063 = vmatmul.mubr.bf16.gmra.mrb[0].mxu0 %v958
          %v1064 = vpop.f32.mrb[0].mxu0
          %v1065 = vadd.f32 %v980, %v1064
          %v1066 = vpop.f32.mrb[0].mxu0
          %v1067 = vpop.f32.mrb[0].mxu0
          %v1068 = vpop.f32.mrb[0].mxu0
          %1069 = vdwg.mxu0
          %1070 = vst [vmem:[#allocation11] sm:$0xff] %v1065
        $region76: #{tpu_custom_call.1} parent=51 // pred_fallthru
          _
        // Predicated region
        $region77: #{tpu_custom_call.1} parent=51 // pred_check
          %p1071 = pneg %p216
        $region78: #{tpu_custom_call.1} parent=51 // pred_check_branch
          %1073 = sbr.rel (%p1071) target = $region80
        $region79: #{tpu_custom_call.1} parent=51 // pred_region
          %s1075 = ssub.s32 128, 128
          %1076 = vsyncadd [#allocation5], %s1075
          %s1078 = sshll.u32 [#allocation11], 4
          %s1079 = int_to_ptr.vmem [resolvable:$true] %s1078
          %1081 = dma.vmem_to_hbm [thread:$0]  %s1079, 128, %s8, [#allocation5]
        $region80: #{tpu_custom_call.1} parent=51 // pred_fallthru
          _
        // Predicated region
        $region81: #{tpu_custom_call.1} parent=51 // pred_check
          %p1082 = pneg %p216
        $region82: #{tpu_custom_call.1} parent=51 // pred_check_branch
          %1084 = sbr.rel (%p1082) target = $region84
        $region83: #{tpu_custom_call.1} parent=51 // pred_region
          %1085 = dma.done [#allocation5], 128
        $region84: #{tpu_custom_call.1} parent=51 // pred_fallthru
          _
      $region52: #{tpu_custom_call.1} parent=5 // pred_fallthru
        _
      %p1086 = scmp.le.s32.totalorder 2, %s20
      // Predicated region
      $region85: #{tpu_custom_call.1} parent=5 // pred_check
        %p1087 = pneg %p1086
      $region86: #{tpu_custom_call.1} parent=5 // pred_check_branch
        %1089 = sbr.rel (%p1087) target = $region88
      $region87: #{tpu_custom_call.1} parent=5 // pred_region
        %s1090 = ssub.s32 %s20, 2
      $region88: #{tpu_custom_call.1} parent=5 // pred_fallthru
        _
    $region6: #{tpu_custom_call.1} parent=1 // loop_footer
      %s24 = sadd.s32 1, %s20
    $region7: #{tpu_custom_call.1} parent=1 // loop_footer_branch
      %19 = sbr.rel target = $region3
    $region8: #{tpu_custom_call.1} parent=1 // loop_exit
      _
    %1091 = vsyncpa [#allocation4], 1
    %s1092 = scalar_lea.sflag [#allocation4], 1
    %1093 = vsyncpa %s1092, 1
    %1094 = vsyncpa [#allocation7], 1
    %1095 = vsyncpa [#allocation10], 1
    %1096 = vsyncpa [#allocation5], 1
    %s1097 = scalar_lea.sflag [#allocation5], 1
    %1098 = vsyncpa %s1097, 1

</llo_original>
